<compile_context>
chip_gen: v5e
topology: v5e:2x2
jax: 0.10.0
libtpu: 0.0.40
codegen_flags: <defaults>
</compile_context>

<pallas_src>
import functools

import jax
import jax.numpy as jnp
import numpy as np
from jax.experimental import pallas as pl
from jax.experimental.pallas import tpu as pltpu


def _round_up(v, m):
    return (v + m - 1) // m * m


def _pad2d(a, rows, cols):
    r, c = a.shape
    if r == rows and c == cols:
        return a
    return jnp.pad(a, ((0, rows - r), (0, cols - c)))


# --------------------------------------------------------------------------- kernel
def _bbb_lrt_kernel(x_ref, wmu_ref, wvar_ref, bmu_ref, bvar_ref, eps_ref,
                    o_ref, mu_acc, var_acc):
    """One (batch-tile i, out-tile j, k-tile) grid step.

    x_ref    : [tm, tk]  input tile (compute dtype, bf16 by default)
    wmu_ref  : [tn, tk]  W_mu block, PyTorch (out, in) layout -> NT matmul, no transpose
    wvar_ref : [tn, tk]  softplus(W_rho)**2 block (precomputed once in the wrapper)
    bmu_ref  : [1, tn]   bias mean slice      (block index constant over k -> one DMA per j)
    bvar_ref : [1, tn]   softplus(b_rho)**2   (idem)
    eps_ref  : [tm, tn]  N(0,1) noise tile    (block index constant over k)
    o_ref    : [tm, tn]  output tile, lane-dense, written once at the last k step
    mu_acc   : [tm, tn]  f32 accumulator for x @ W_mu.T
    var_acc  : [tm, tn]  f32 accumulator for x**2 @ softplus(W_rho)**2.T
    """
    k = pl.program_id(2)
    nk = pl.num_programs(2)

    @pl.when(k == 0)
    def _():
        mu_acc[...] = jnp.zeros_like(mu_acc)
        var_acc[...] = jnp.zeros_like(var_acc)

    x = x_ref[...]
    x2 = x * x  # cheap VPU work; recomputed so no cross-tile scratch is carried
    dn = (((1,), (1,)), ((), ()))  # contract last dims: (tm,tk) x (tn,tk) -> (tm,tn)
    mu_acc[...] += jax.lax.dot_general(x, wmu_ref[...], dn,
                                       preferred_element_type=jnp.float32)
    var_acc[...] += jax.lax.dot_general(x2, wvar_ref[...], dn,
                                        preferred_element_type=jnp.float32)

    @pl.when(k == nk - 1)
    def _():
        act_mu = mu_acc[...] + bmu_ref[...].astype(jnp.float32)
        act_var = 1e-16 + var_acc[...] + bvar_ref[...].astype(jnp.float32)
        out = act_mu + jnp.sqrt(act_var) * eps_ref[...].astype(jnp.float32)
        o_ref[...] = out.astype(o_ref.dtype)


# --------------------------------------------------------------------------- wrapper
@functools.partial(jax.jit, static_argnames=("compute_dtype", "tm", "tn", "tk"))
def bbb_lrt_linear_forward(x, w_mu, w_rho, bias_mu, bias_rho, *,
                           eps=None, key=None,
                           compute_dtype=jnp.bfloat16, tm=256, tn=256, tk=512):
    """BBB-LRT linear forward.

    x        : [B, K]          output keeps x.dtype; MXU operands use compute_dtype
    w_mu     : [N, K]          PyTorch layout (out_features, in_features) — no transpose
    w_rho    : [N, K]
    bias_mu  : [N]
    bias_rho : [N]
    eps      : optional [B, N] N(0,1) noise (deterministic / testing path)
    key      : optional PRNG key used when eps is None
    """
    B, K = x.shape
    N = w_mu.shape[0]
    out_dtype = x.dtype

    # One-time (per call) parameter transforms, hoisted out of the kernel.
    w_mu_c = w_mu.astype(compute_dtype)
    w_var_c = jnp.square(jax.nn.softplus(w_rho)).astype(compute_dtype)
    b_mu2 = jnp.reshape(bias_mu, (1, N)).astype(jnp.float32)
    b_var2 = jnp.reshape(jnp.square(jax.nn.softplus(bias_rho)), (1, N)).astype(jnp.float32)
    # TODO(synk): cache w_var_c / b_var2 across calls when W_rho is frozen (inference).

    # Lane/sublane-friendly tiling + zero padding (K tiled -> VMEM independent of K).
    tn = max(128, min(_round_up(tn, 128), _round_up(N, 128)))   # lane-dense output stores
    tk = max(128, min(_round_up(tk, 128), _round_up(K, 128)))
    tm = max(8, min(_round_up(tm, 8), _round_up(B, 8)))         # don't over-pad tiny batches
    B_pad = _round_up(B, tm)
    K_pad = _round_up(K, tk)
    N_pad = _round_up(N, tn)

    x_p = _pad2d(x.astype(compute_dtype), B_pad, K_pad)
    w_mu_p = _pad2d(w_mu_c, N_pad, K_pad)
    w_var_p = _pad2d(w_var_c, N_pad, K_pad)
    b_mu_p = _pad2d(b_mu2, 1, N_pad)
    b_var_p = _pad2d(b_var2, 1, N_pad)

    if eps is None:
        # TODO(synk): generate noise on-chip (pltpu.prng_seed + stateful_normal) once the
        # runtime supports it; kept wrapper-side (narrow dtype) for portability here.
        if key is None:
            key = jax.random.PRNGKey(0)
        eps = jax.random.normal(key, (B, N), dtype=compute_dtype)
    eps_p = _pad2d(eps, B_pad, N_pad)   # streamed in its own (narrow) dtype, no f32 upcast

    grid = (B_pad // tm, N_pad // tn, K_pad // tk)
    nb, nn, nk = grid

    cbytes = jnp.dtype(compute_dtype).itemsize
    ebytes = jnp.dtype(eps_p.dtype).itemsize
    obytes = jnp.dtype(out_dtype).itemsize

    cost = pl.CostEstimate(
        flops=4 * B_pad * K_pad * N_pad,          # two matmuls
        transcendentals=B_pad * N_pad,            # sqrt
        bytes_accessed=int(
            B_pad * K_pad * cbytes * nn           # x re-read once per out-feature tile
            + 2 * N_pad * K_pad * cbytes * nb     # both weight streams, re-read per batch tile
            + B_pad * N_pad * (ebytes + obytes)   # eps in, out
            + 2 * N_pad * 4))                     # biases

    # Working set: double-buffered input/output blocks + two single-buffered f32 accs.
    vmem_est = (2 * (tm * tk * cbytes + 2 * tn * tk * cbytes
                     + tm * tn * (ebytes + obytes) + 2 * tn * 4)
                + 2 * tm * tn * 4)
    vmem_limit = min(40 << 20, max(32 << 20, int(vmem_est * 5 // 4)))  # v7x-safe cap

    out = pl.pallas_call(
        _bbb_lrt_kernel,
        out_shape=jax.ShapeDtypeStruct((B_pad, N_pad), out_dtype),
        grid_spec=pltpu.PrefetchScalarGridSpec(
            num_scalar_prefetch=0,
            grid=grid,
            in_specs=[
                pl.BlockSpec((tm, tk), lambda i, j, k: (i, k)),   # x tile
                pl.BlockSpec((tn, tk), lambda i, j, k: (j, k)),   # W_mu block (N,K layout)
                pl.BlockSpec((tn, tk), lambda i, j, k: (j, k)),   # softplus(W_rho)^2 block
                pl.BlockSpec((1, tn), lambda i, j, k: (0, j)),    # bias_mu  (const over i,k)
                pl.BlockSpec((1, tn), lambda i, j, k: (0, j)),    # bias_var (const over i,k)
                pl.BlockSpec((tm, tn), lambda i, j, k: (i, j)),   # eps tile (const over k)
            ],
            out_specs=pl.BlockSpec((tm, tn), lambda i, j, k: (i, j)),
            scratch_shapes=[pltpu.VMEM((tm, tn), jnp.float32),    # mu accumulator
                            pltpu.VMEM((tm, tn), jnp.float32)],   # var accumulator
        ),
        compiler_params=pltpu.CompilerParams(
            # i and j are both independent -> megacore can shard either; k carries the accs.
            dimension_semantics=("parallel", "parallel", "arbitrary"),
            vmem_limit_bytes=vmem_limit,
        ),
        cost_estimate=cost,
    )(x_p, w_mu_p, w_var_p, b_mu_p, b_var_p, eps_p)

    return out[:B, :N]


# --------------------------------------------------------------------------- glue
def kl_div(prior_mu, prior_sigma, mu, sigma):
    """KL(N(mu, sigma) || N(prior_mu, prior_sigma)), summed (ModuleWrapper.kl_loss glue)."""
    return 0.5 * jnp.sum(
        2.0 * jnp.log(prior_sigma / sigma)
        - 1.0
        + (sigma / prior_sigma) ** 2
        + ((prior_mu - mu) / prior_sigma) ** 2
    )


def reference_forward(x, w_mu, w_rho, b_mu, b_rho, eps):
    """Pure-JAX reference mirroring the PyTorch forward (sample=True), f32."""
    w_sigma = jax.nn.softplus(w_rho)
    b_sigma = jax.nn.softplus(b_rho)
    act_mu = x @ w_mu.T + b_mu
    act_var = 1e-16 + (x ** 2) @ (w_sigma ** 2).T + b_sigma ** 2
    return act_mu + jnp.sqrt(act_var) * eps


def reference_forward_cast(x, w_mu, w_var, b_mu, b_var, eps, cast_dtype):
    """Reference applying the same low-precision operand rounding as the kernel."""
    f32 = jnp.float32
    xc = x.astype(cast_dtype)
    x2c = xc * xc                                         # squared in the compute dtype
    act_mu = jnp.dot(xc.astype(f32), w_mu.astype(cast_dtype).astype(f32).T) + b_mu
    act_var = 1e-16 + jnp.dot(x2c.astype(f32), w_var.astype(cast_dtype).astype(f32).T) + b_var
    return act_mu + jnp.sqrt(act_var) * eps.astype(f32)


if __name__ == "__main__":
    key = jax.random.PRNGKey(0)
    ks = jax.random.split(key, 8)

    # ------------------ small config (module-consistent shapes), f32 parity ------------------
    batch, in_features, out_features = 16, 48, 40
    # reset_parameters(): W_mu ~ N(0, 0.1), W_rho ~ N(-3, 0.1), bias likewise.
    w_mu = 0.0 + 0.1 * jax.random.normal(ks[0], (out_features, in_features), jnp.float32)
    w_rho = -3.0 + 0.1 * jax.random.normal(ks[1], (out_features, in_features), jnp.float32)
    b_mu = 0.0 + 0.1 * jax.random.normal(ks[2], (out_features,), jnp.float32)
    b_rho = -3.0 + 0.1 * jax.random.normal(ks[3], (out_features,), jnp.float32)
    x = jax.random.normal(ks[4], (batch, in_features), jnp.float32)
    eps = jax.random.normal(ks[5], (batch, out_features), jnp.float32)

    # Deterministic (external-eps) path with f32 MXU operands, checked against the reference
    # (exact in interpret mode; tolerance absorbs TPU f32-matmul pass differences).
    out = jax.block_until_ready(
        bbb_lrt_linear_forward(x, w_mu, w_rho, b_mu, b_rho, eps=eps,
                               compute_dtype=jnp.float32))
    ref = reference_forward(x, w_mu, w_rho, b_mu, b_rho, eps)
    np.testing.assert_allclose(np.asarray(out), np.asarray(ref), rtol=1e-2, atol=1e-2)
    assert out.shape == (batch, out_features)

    # ModuleWrapper.forward also returns the KL term (plain-JAX glue).
    w_sigma = jax.nn.softplus(w_rho)
    b_sigma = jax.nn.softplus(b_rho)
    kl = kl_div(0.0, 0.1, w_mu, w_sigma) + kl_div(0.0, 0.1, b_mu, b_sigma)
    assert np.isfinite(float(jax.block_until_ready(kl)))

    # Wrapper-generated noise path (default bf16 MXU operands, f32 accumulation).
    out_rng = jax.block_until_ready(
        bbb_lrt_linear_forward(x, w_mu, w_rho, b_mu, b_rho, key=ks[6]))
    act_mu_only = reference_forward(x, w_mu, w_rho, b_mu, b_rho, jnp.zeros_like(eps))
    assert out_rng.shape == (batch, out_features)
    assert np.all(np.isfinite(np.asarray(out_rng)))
    assert float(jnp.max(jnp.abs(out_rng - act_mu_only))) > 0.0

    # ------------------ larger bf16 config: full (2, 2, 2) grid with K accumulation ----------
    Bb, Kb, Nb = 256, 256, 384
    kb = jax.random.split(ks[7], 6)
    w_mu_b = 0.0 + 0.1 * jax.random.normal(kb[0], (Nb, Kb), jnp.float32)
    w_rho_b = -3.0 + 0.1 * jax.random.normal(kb[1], (Nb, Kb), jnp.float32)
    b_mu_b = 0.0 + 0.1 * jax.random.normal(kb[2], (Nb,), jnp.float32)
    b_rho_b = -3.0 + 0.1 * jax.random.normal(kb[3], (Nb,), jnp.float32)
    x_b = jax.random.normal(kb[4], (Bb, Kb), jnp.float32)
    eps_b = jax.random.normal(kb[5], (Bb, Nb), jnp.float32)

    out_b = jax.block_until_ready(
        bbb_lrt_linear_forward(x_b, w_mu_b, w_rho_b, b_mu_b, b_rho_b, eps=eps_b,
                               tm=128, tn=256, tk=128))   # forces 2x2x2 grid
    w_var_b = jnp.square(jax.nn.softplus(w_rho_b))
    b_var_b = jnp.square(jax.nn.softplus(b_rho_b))
    ref_b = reference_forward_cast(x_b, w_mu_b, w_var_b, b_mu_b, b_var_b, eps_b,
                                   jnp.bfloat16)
    np.testing.assert_allclose(np.asarray(out_b), np.asarray(ref_b), rtol=5e-2, atol=5e-2)

    print("KERNEL_OK")
</pallas_src>

<mosaic_0001>
module attributes {stable_mosaic.version = 11 : i64} {
  func.func @_bbb_lrt_kernel(%arg0: i32, %arg1: i32, %arg2: i32, %arg3: memref<16x128xf32, #tpu.memory_space<vmem>>, %arg4: memref<128x128xf32, #tpu.memory_space<vmem>>, %arg5: memref<128x128xf32, #tpu.memory_space<vmem>>, %arg6: memref<1x128xf32, #tpu.memory_space<vmem>>, %arg7: memref<1x128xf32, #tpu.memory_space<vmem>>, %arg8: memref<16x128xf32, #tpu.memory_space<vmem>>, %arg9: memref<16x128xf32, #tpu.memory_space<vmem>>, %arg10: memref<16x128xf32, #tpu.memory_space<vmem>>, %arg11: memref<16x128xf32, #tpu.memory_space<vmem>>) attributes {dimension_semantics = [#tpu.dimension_semantics<parallel>, #tpu.dimension_semantics<parallel>, #tpu.dimension_semantics<arbitrary>], iteration_bounds = array<i64: 1, 1, 1>, scalar_prefetch = 0 : i64, scratch_operands = 2 : i64, tpu.core_type = #tpu.core_type<tc>, window_params = [{transform_indices = @transform_0, window_bounds = array<i64: 16, 128>}, {transform_indices = @transform_1, window_bounds = array<i64: 128, 128>}, {transform_indices = @transform_2, window_bounds = array<i64: 128, 128>}, {transform_indices = @transform_3, window_bounds = array<i64: 1, 128>}, {transform_indices = @transform_4, window_bounds = array<i64: 1, 128>}, {transform_indices = @transform_5, window_bounds = array<i64: 16, 128>}, {transform_indices = @transform_6, window_bounds = array<i64: 16, 128>}]} {
    %c0_i32 = arith.constant 0 : i32
    %0 = arith.cmpi eq, %arg2, %c0_i32 : i32
    %1 = arith.extui %0 : i1 to i32
    %c0_i32_0 = arith.constant 0 : i32
    %2 = arith.cmpi ne, %1, %c0_i32_0 : i32
    scf.if %2 {
      %cst_17 = arith.constant 0.000000e+00 : f32
      %18 = vector.broadcast %cst_17 : f32 to vector<16x128xf32>
      %c0_18 = arith.constant 0 : index
      %c0_19 = arith.constant 0 : index
      %19 = vector.load %arg10[%c0_18, %c0_19] : memref<16x128xf32, #tpu.memory_space<vmem>>, vector<16x128xf32>
      tpu.vector_store %arg10[%c0_18, %c0_19], %18 {strides = array<i32>} : memref<16x128xf32, #tpu.memory_space<vmem>>, vector<16x128xf32>,
      %cst_20 = arith.constant 0.000000e+00 : f32
      %20 = vector.broadcast %cst_20 : f32 to vector<16x128xf32>
      %c0_21 = arith.constant 0 : index
      %c0_22 = arith.constant 0 : index
      %21 = vector.load %arg11[%c0_21, %c0_22] : memref<16x128xf32, #tpu.memory_space<vmem>>, vector<16x128xf32>
      tpu.vector_store %arg11[%c0_21, %c0_22], %20 {strides = array<i32>} : memref<16x128xf32, #tpu.memory_space<vmem>>, vector<16x128xf32>,
    } else {
    }
    %c0 = arith.constant 0 : index
    %c0_1 = arith.constant 0 : index
    %3 = vector.load %arg3[%c0, %c0_1] : memref<16x128xf32, #tpu.memory_space<vmem>>, vector<16x128xf32>
    %4 = arith.mulf %3, %3 : vector<16x128xf32>
    %c0_2 = arith.constant 0 : index
    %c0_3 = arith.constant 0 : index
    %5 = vector.load %arg10[%c0_2, %c0_3] : memref<16x128xf32, #tpu.memory_space<vmem>>, vector<16x128xf32>
    %c0_4 = arith.constant 0 : index
    %c0_5 = arith.constant 0 : index
    %6 = vector.load %arg4[%c0_4, %c0_5] : memref<128x128xf32, #tpu.memory_space<vmem>>, vector<128x128xf32>
    %cst = arith.constant dense<0.000000e+00> : vector<16x128xf32>
    %7 = tpu.matmul %3, %6, %cst {dimension_numbers = #tpu.dot_dimension_numbers<[1], [1], [0], [0], [0, 0, 1, 0], [], []>} : vector<16x128xf32>, vector<128x128xf32>, vector<16x128xf32> -> vector<16x128xf32>
    %8 = arith.addf %5, %7 : vector<16x128xf32>
    %c0_6 = arith.constant 0 : index
    %c0_7 = arith.constant 0 : index
    %9 = vector.load %arg10[%c0_6, %c0_7] : memref<16x128xf32, #tpu.memory_space<vmem>>, vector<16x128xf32>
    tpu.vector_store %arg10[%c0_6, %c0_7], %8 {strides = array<i32>} : memref<16x128xf32, #tpu.memory_space<vmem>>, vector<16x128xf32>,
    %c0_8 = arith.constant 0 : index
    %c0_9 = arith.constant 0 : index
    %10 = vector.load %arg11[%c0_8, %c0_9] : memref<16x128xf32, #tpu.memory_space<vmem>>, vector<16x128xf32>
    %c0_10 = arith.constant 0 : index
    %c0_11 = arith.constant 0 : index
    %11 = vector.load %arg5[%c0_10, %c0_11] : memref<128x128xf32, #tpu.memory_space<vmem>>, vector<128x128xf32>
    %cst_12 = arith.constant dense<0.000000e+00> : vector<16x128xf32>
    %12 = tpu.matmul %4, %11, %cst_12 {dimension_numbers = #tpu.dot_dimension_numbers<[1], [1], [0], [0], [0, 0, 1, 0], [], []>} : vector<16x128xf32>, vector<128x128xf32>, vector<16x128xf32> -> vector<16x128xf32>
    %13 = arith.addf %10, %12 : vector<16x128xf32>
    %c0_13 = arith.constant 0 : index
    %c0_14 = arith.constant 0 : index
    %14 = vector.load %arg11[%c0_13, %c0_14] : memref<16x128xf32, #tpu.memory_space<vmem>>, vector<16x128xf32>
    tpu.vector_store %arg11[%c0_13, %c0_14], %13 {strides = array<i32>} : memref<16x128xf32, #tpu.memory_space<vmem>>, vector<16x128xf32>,
    %c0_i32_15 = arith.constant 0 : i32
    %15 = arith.cmpi eq, %arg2, %c0_i32_15 : i32
    %16 = arith.extui %15 : i1 to i32
    %c0_i32_16 = arith.constant 0 : i32
    %17 = arith.cmpi ne, %16, %c0_i32_16 : i32
    scf.if %17 {
      %c0_17 = arith.constant 0 : index
      %c0_18 = arith.constant 0 : index
      %18 = vector.load %arg10[%c0_17, %c0_18] : memref<16x128xf32, #tpu.memory_space<vmem>>, vector<16x128xf32>
      %c0_19 = arith.constant 0 : index
      %c0_20 = arith.constant 0 : index
      %19 = vector.load %arg6[%c0_19, %c0_20] : memref<1x128xf32, #tpu.memory_space<vmem>>, vector<1x128xf32>
      %20 = vector.broadcast %19 : vector<1x128xf32> to vector<16x128xf32>
      %21 = arith.addf %18, %20 : vector<16x128xf32>
      %c0_21 = arith.constant 0 : index
      %c0_22 = arith.constant 0 : index
      %22 = vector.load %arg11[%c0_21, %c0_22] : memref<16x128xf32, #tpu.memory_space<vmem>>, vector<16x128xf32>
      %cst_23 = arith.constant 1.000000e-16 : f32
      %23 = vector.broadcast %cst_23 : f32 to vector<16x128xf32>
      %24 = arith.addf %23, %22 : vector<16x128xf32>
      %c0_24 = arith.constant 0 : index
      %c0_25 = arith.constant 0 : index
      %25 = vector.load %arg7[%c0_24, %c0_25] : memref<1x128xf32, #tpu.memory_space<vmem>>, vector<1x128xf32>
      %26 = vector.broadcast %25 : vector<1x128xf32> to vector<16x128xf32>
      %27 = arith.addf %24, %26 : vector<16x128xf32>
      %28 = math.sqrt %27 : vector<16x128xf32>
      %c0_26 = arith.constant 0 : index
      %c0_27 = arith.constant 0 : index
      %29 = vector.load %arg8[%c0_26, %c0_27] : memref<16x128xf32, #tpu.memory_space<vmem>>, vector<16x128xf32>
      %30 = arith.mulf %28, %29 : vector<16x128xf32>
      %31 = arith.addf %21, %30 : vector<16x128xf32>
      %c0_28 = arith.constant 0 : index
      %c0_29 = arith.constant 0 : index
      %32 = vector.load %arg9[%c0_28, %c0_29] : memref<16x128xf32, #tpu.memory_space<vmem>>, vector<16x128xf32>
      tpu.vector_store %arg9[%c0_28, %c0_29], %31 {strides = array<i32>} : memref<16x128xf32, #tpu.memory_space<vmem>>, vector<16x128xf32>,
    } else {
    }
    return
  }
  func.func @transform_0(%arg0: i32, %arg1: i32, %arg2: i32) -> (i32, i32) {
    %c0_i32 = arith.constant 0 : i32
    return %arg0, %arg2 : i32, i32
  }
  func.func @transform_1(%arg0: i32, %arg1: i32, %arg2: i32) -> (i32, i32) {
    %c0_i32 = arith.constant 0 : i32
    return %arg1, %arg2 : i32, i32
  }
  func.func @transform_2(%arg0: i32, %arg1: i32, %arg2: i32) -> (i32, i32) {
    %c0_i32 = arith.constant 0 : i32
    return %arg1, %arg2 : i32, i32
  }
  func.func @transform_3(%arg0: i32, %arg1: i32, %arg2: i32) -> (i32, i32) {
    %c0_i32 = arith.constant 0 : i32
    %c0_i32_0 = arith.constant 0 : i32
    return %c0_i32, %arg1 : i32, i32
  }
  func.func @transform_4(%arg0: i32, %arg1: i32, %arg2: i32) -> (i32, i32) {
    %c0_i32 = arith.constant 0 : i32
    %c0_i32_0 = arith.constant 0 : i32
    return %c0_i32, %arg1 : i32, i32
  }
  func.func @transform_5(%arg0: i32, %arg1: i32, %arg2: i32) -> (i32, i32) {
    %c0_i32 = arith.constant 0 : i32
    return %arg0, %arg1 : i32, i32
  }
  func.func @transform_6(%arg0: i32, %arg1: i32, %arg2: i32) -> (i32, i32) {
    %c0_i32 = arith.constant 0 : i32
    return %arg0, %arg1 : i32, i32
  }
}

</mosaic_0001>

<llo_original>
// kernel: bbb_lrt_linear_forward.1
$region0: #{bbb_lrt_linear_forward.1}
  #allocation0 [shape = 'u32[]', space=smem, size = 0x4, offset = 0x4, fixed_abs, tag = 'smem constant byte address 0x4 - core index']
  #allocation1 [shape = 'u32[72,128]{1,0:T(1,128)}', space=vmem, size = 0x9000, scoped, tag = 'internal scratch']
  #allocation2 [shape = 'f32[16,128]{1,0:T(8,128)}', space=vmem, size = 0x2000, scoped, tag = 'scratch operand']
  #allocation3 [shape = 'f32[16,128]{1,0:T(8,128)}', space=vmem, size = 0x2000, scoped, tag = 'scratch operand']
  %s0 = inlined_call_operand.vmem [shape: f32[16,128], index: 0, kind: input, shape index: {}]
  %s1 = inlined_call_operand.vmem [shape: f32[128,128], index: 1, kind: input, shape index: {}]
  %s2 = inlined_call_operand.vmem [shape: f32[128,128], index: 2, kind: input, shape index: {}]
  %s3 = inlined_call_operand.vmem [shape: f32[1,128], index: 3, kind: input, shape index: {}]
  %s4 = inlined_call_operand.vmem [shape: f32[1,128], index: 4, kind: input, shape index: {}]
  %s5 = inlined_call_operand.vmem [shape: f32[16,128], index: 5, kind: input, shape index: {}]
  %s6 = inlined_call_operand.hbm [shape: f32[16,128], index: 6, kind: output, shape index: {}]
  %s7 = sld [smem:[#allocation0]]
  $region42: #{bbb_lrt_linear_forward.1} parent=0
    _
  %s9 = ssub.s32 1, %s7
  %s10 = scalar_select 0, %s9, %s7
  $region1: #{bbb_lrt_linear_forward.1} parent=0
    #allocation4 [shape = 'u8[8192]{0}', space=vmem, size = 0x2000, scoped, tag = 'output window, operand 0, single buffered']
    #allocation5 [shape = 's32[1]{0}', space=sflag, size = 0x4, scoped, tag = 'scoped memory for bbb_lrt_linear_forward.1']
    %11 = vsyncpa [#allocation5], 0
    // Predicated region
    $region2: #{bbb_lrt_linear_forward.1} parent=1 // pred_check
      _
    $region3: #{bbb_lrt_linear_forward.1} parent=1 // pred_check_branch
      %13 = sbr.rel (0) target = $region5
    $region4: #{bbb_lrt_linear_forward.1} parent=1 // pred_region
      _
    $region5: #{bbb_lrt_linear_forward.1} parent=1 // pred_fallthru
      _
    // Predicated region
    $region6: #{bbb_lrt_linear_forward.1} parent=1 // pred_check
      _
    $region7: #{bbb_lrt_linear_forward.1} parent=1 // pred_check_branch
      %15 = sbr.rel (0) target = $region9
    $region8: #{bbb_lrt_linear_forward.1} parent=1 // pred_region
      _
    $region9: #{bbb_lrt_linear_forward.1} parent=1 // pred_fallthru
      _
    // Predicated region
    $region10: #{bbb_lrt_linear_forward.1} parent=1 // pred_check
      _
    $region11: #{bbb_lrt_linear_forward.1} parent=1 // pred_check_branch
      %17 = sbr.rel (0) target = $region13
    $region12: #{bbb_lrt_linear_forward.1} parent=1 // pred_region
      _
    $region13: #{bbb_lrt_linear_forward.1} parent=1 // pred_fallthru
      _
    // Predicated region
    $region14: #{bbb_lrt_linear_forward.1} parent=1 // pred_check
      _
    $region15: #{bbb_lrt_linear_forward.1} parent=1 // pred_check_branch
      %19 = sbr.rel (0) target = $region17
    $region16: #{bbb_lrt_linear_forward.1} parent=1 // pred_region
      _
    $region17: #{bbb_lrt_linear_forward.1} parent=1 // pred_fallthru
      _
    // Predicated region
    $region18: #{bbb_lrt_linear_forward.1} parent=1 // pred_check
      _
    $region19: #{bbb_lrt_linear_forward.1} parent=1 // pred_check_branch
      %21 = sbr.rel (0) target = $region21
    $region20: #{bbb_lrt_linear_forward.1} parent=1 // pred_region
      _
    $region21: #{bbb_lrt_linear_forward.1} parent=1 // pred_fallthru
      _
    // Predicated region
    $region22: #{bbb_lrt_linear_forward.1} parent=1 // pred_check
      _
    $region23: #{bbb_lrt_linear_forward.1} parent=1 // pred_check_branch
      %23 = sbr.rel (0) target = $region25
    $region24: #{bbb_lrt_linear_forward.1} parent=1 // pred_region
      _
    $region25: #{bbb_lrt_linear_forward.1} parent=1 // pred_fallthru
      _
    %p24 = scmp.eq.s32.totalorder 0, 0
    // Predicated region
    $region26: #{bbb_lrt_linear_forward.1} parent=1 // pred_check
      %p25 = pneg %p24
    $region27: #{bbb_lrt_linear_forward.1} parent=1 // pred_check_branch
      %27 = sbr.rel (%p25) target = $region29
    $region28: #{bbb_lrt_linear_forward.1} parent=1 // pred_region
      %28 = vst [vmem:[#allocation2] sm:$0xff] 0.0
      %29 = vst [vmem:[#allocation2 + $0x8] sm:$0xff] 0.0
      %30 = vst [vmem:[#allocation3] sm:$0xff] 0.0
      %31 = vst [vmem:[#allocation3 + $0x8] sm:$0xff] 0.0
    $region29: #{bbb_lrt_linear_forward.1} parent=1 // pred_fallthru
      _
    %v32 = vld [vmem:[%s0] sm:$0xff]
    %v33 = vld [vmem:[%s0 + $0x8] sm:$0xff]
    %v34 = vmul.f32 %v32, %v32
    %v35 = vmul.f32 %v33, %v33
    %v36 = vld [vmem:[#allocation2] sm:$0xff]
    %v37 = vld [vmem:[#allocation2 + $0x8] sm:$0xff]
    %v38 = vld [vmem:[%s1] sm:$0xff]
    %v39 = vld [vmem:[%s1 + $0x8] sm:$0xff]
    %v40 = vld [vmem:[%s1 + $0x10] sm:$0xff]
    %v41 = vld [vmem:[%s1 + $0x18] sm:$0xff]
    %v42 = vld [vmem:[%s1 + $0x20] sm:$0xff]
    %v43 = vld [vmem:[%s1 + $0x28] sm:$0xff]
    %v44 = vld [vmem:[%s1 + $0x30] sm:$0xff]
    %v45 = vld [vmem:[%s1 + $0x38] sm:$0xff]
    %v46 = vld [vmem:[%s1 + $0x40] sm:$0xff]
    %v47 = vld [vmem:[%s1 + $0x48] sm:$0xff]
    %v48 = vld [vmem:[%s1 + $0x50] sm:$0xff]
    %v49 = vld [vmem:[%s1 + $0x58] sm:$0xff]
    %v50 = vld [vmem:[%s1 + $0x60] sm:$0xff]
    %v51 = vld [vmem:[%s1 + $0x68] sm:$0xff]
    %v52 = vld [vmem:[%s1 + $0x70] sm:$0xff]
    %v53 = vld [vmem:[%s1 + $0x78] sm:$0xff]
    %54 = vmatpush.xpose.msra.mxu0 %v53
    %55 = vmatpush.xpose.msra.mxu0 %v52
    %56 = vmatpush.xpose.msra.mxu0 %v51
    %57 = vmatpush.xpose.msra.mxu0 %v50
    %58 = vmatpush.xpose.msra.mxu0 %v49
    %59 = vmatpush.xpose.msra.mxu0 %v48
    %60 = vmatpush.xpose.msra.mxu0 %v47
    %61 = vmatpush.xpose.msra.mxu0 %v46
    %62 = vmatpush.xpose.msra.mxu0 %v45
    %63 = vmatpush.xpose.msra.mxu0 %v44
    %64 = vmatpush.xpose.msra.mxu0 %v43
    %65 = vmatpush.xpose.msra.mxu0 %v42
    %66 = vmatpush.xpose.msra.mxu0 %v41
    %67 = vmatpush.xpose.msra.mxu0 %v40
    %68 = vmatpush.xpose.msra.mxu0 %v39
    %69 = vmatpush.xpose.msra.mxu0 %v38
    %70 = vmatmul.f32.gmra.mxu0 %v32
    %v71 = vpop.f32.mrf.mxu0
    %v72 = vadd.f32 0.0, %v71
    %73 = vmatmul.f32.gmra.mxu0 %v33
    %v74 = vpop.f32.mrf.mxu0
    %v75 = vadd.f32 0.0, %v74
    %76 = vdwg.mxu0
    %v77 = vadd.f32 %v36, %v72
    %v78 = vadd.f32 %v37, %v75
    %79 = vst [vmem:[#allocation2] sm:$0xff] %v77
    %80 = vst [vmem:[#allocation2 + $0x8] sm:$0xff] %v78
    %v81 = vld [vmem:[#allocation3] sm:$0xff]
    %v82 = vld [vmem:[#allocation3 + $0x8] sm:$0xff]
    %v83 = vld [vmem:[%s2] sm:$0xff]
    %v84 = vld [vmem:[%s2 + $0x8] sm:$0xff]
    %v85 = vld [vmem:[%s2 + $0x10] sm:$0xff]
    %v86 = vld [vmem:[%s2 + $0x18] sm:$0xff]
    %v87 = vld [vmem:[%s2 + $0x20] sm:$0xff]
    %v88 = vld [vmem:[%s2 + $0x28] sm:$0xff]
    %v89 = vld [vmem:[%s2 + $0x30] sm:$0xff]
    %v90 = vld [vmem:[%s2 + $0x38] sm:$0xff]
    %v91 = vld [vmem:[%s2 + $0x40] sm:$0xff]
    %v92 = vld [vmem:[%s2 + $0x48] sm:$0xff]
    %v93 = vld [vmem:[%s2 + $0x50] sm:$0xff]
    %v94 = vld [vmem:[%s2 + $0x58] sm:$0xff]
    %v95 = vld [vmem:[%s2 + $0x60] sm:$0xff]
    %v96 = vld [vmem:[%s2 + $0x68] sm:$0xff]
    %v97 = vld [vmem:[%s2 + $0x70] sm:$0xff]
    %v98 = vld [vmem:[%s2 + $0x78] sm:$0xff]
    %99 = vmatpush.xpose.msra.mxu0 %v98
    %100 = vmatpush.xpose.msra.mxu0 %v97
    %101 = vmatpush.xpose.msra.mxu0 %v96
    %102 = vmatpush.xpose.msra.mxu0 %v95
    %103 = vmatpush.xpose.msra.mxu0 %v94
    %104 = vmatpush.xpose.msra.mxu0 %v93
    %105 = vmatpush.xpose.msra.mxu0 %v92
    %106 = vmatpush.xpose.msra.mxu0 %v91
    %107 = vmatpush.xpose.msra.mxu0 %v90
    %108 = vmatpush.xpose.msra.mxu0 %v89
    %109 = vmatpush.xpose.msra.mxu0 %v88
    %110 = vmatpush.xpose.msra.mxu0 %v87
    %111 = vmatpush.xpose.msra.mxu0 %v86
    %112 = vmatpush.xpose.msra.mxu0 %v85
    %113 = vmatpush.xpose.msra.mxu0 %v84
    %114 = vmatpush.xpose.msra.mxu0 %v83
    %115 = vmatmul.f32.gmra.mxu0 %v34
    %v116 = vpop.f32.mrf.mxu0
    %v117 = vadd.f32 0.0, %v116
    %118 = vmatmul.f32.gmra.mxu0 %v35
    %v119 = vpop.f32.mrf.mxu0
    %v120 = vadd.f32 0.0, %v119
    %121 = vdwg.mxu0
    %v122 = vadd.f32 %v81, %v117
    %v123 = vadd.f32 %v82, %v120
    %124 = vst [vmem:[#allocation3] sm:$0xff] %v122
    %125 = vst [vmem:[#allocation3 + $0x8] sm:$0xff] %v123
    // Predicated region
    $region30: #{bbb_lrt_linear_forward.1} parent=1 // pred_check
      %p126 = pneg %p24
    $region31: #{bbb_lrt_linear_forward.1} parent=1 // pred_check_branch
      %128 = sbr.rel (%p126) target = $region33
    $region32: #{bbb_lrt_linear_forward.1} parent=1 // pred_region
      %v129 = vld [vmem:[#allocation2] sm:$0xff]
      %v130 = vld [vmem:[#allocation2 + $0x8] sm:$0xff]
      %v131 = vld [vmem:[%s3] sm:$0x1]
      %v133 = vperm.slane %v131, 0
      %v135 = vadd.f32 %v129, %v133
      %v136 = vadd.f32 %v130, %v133
      %v137 = vld [vmem:[#allocation3] sm:$0xff]
      %v138 = vld [vmem:[#allocation3 + $0x8] sm:$0xff]
      %v139 = vadd.f32 %v137, 1e-16
      %v140 = vadd.f32 %v138, 1e-16
      %v141 = vld [vmem:[%s4] sm:$0x1]
      %v143 = vperm.slane %v141, 0
      %v145 = vadd.f32 %v139, %v143
      %v146 = vadd.f32 %v140, %v143
      %v147 = vrsqrt.pop %v145
      %v148 = vmul.f32 %v147, %v145
      %v149 = vmul.f32 %v148, %v147
      %v150 = vmul.f32 0.5, %v149
      %v151 = vsub.f32 1.5, %v150
      %v152 = vmul.f32 %v147, %v151
      %v153 = vmul.f32 %v145, %v152
      %vm154 = vcmp.eq.f32.partialorder %v145, inf
      %v155 = vsel %vm154, %v145, %v153
      %vm156 = vcmp.eq.f32.partialorder %v145, 0.0
      %v157 = vand.u32 %v145, 2147483648
      %v158 = vsel %vm156, %v157, %v155
      %v159 = vrsqrt.pop %v146
      %v160 = vmul.f32 %v159, %v146
      %v161 = vmul.f32 %v160, %v159
      %v162 = vmul.f32 0.5, %v161
      %v163 = vsub.f32 1.5, %v162
      %v164 = vmul.f32 %v159, %v163
      %v165 = vmul.f32 %v146, %v164
      %vm166 = vcmp.eq.f32.partialorder %v146, inf
      %v167 = vsel %vm166, %v146, %v165
      %vm168 = vcmp.eq.f32.partialorder %v146, 0.0
      %v169 = vand.u32 %v146, 2147483648
      %v170 = vsel %vm168, %v169, %v167
      %v171 = vld [vmem:[%s5] sm:$0xff]
      %v172 = vld [vmem:[%s5 + $0x8] sm:$0xff]
      %v173 = vmul.f32 %v158, %v171
      %v174 = vmul.f32 %v170, %v172
      %v175 = vadd.f32 %v135, %v173
      %v176 = vadd.f32 %v136, %v174
      %177 = vst [vmem:[#allocation4] sm:$0xff] %v175
      %178 = vst [vmem:[#allocation4 + $0x8] sm:$0xff] %v176
    $region33: #{bbb_lrt_linear_forward.1} parent=1 // pred_fallthru
      _
    // Predicated region
    $region34: #{bbb_lrt_linear_forward.1} parent=1 // pred_check
      _
    $region35: #{bbb_lrt_linear_forward.1} parent=1 // pred_check_branch
      %180 = sbr.rel (0) target = $region37
    $region36: #{bbb_lrt_linear_forward.1} parent=1 // pred_region
      %182 = vsyncadd [#allocation5], 0
      %s183 = sshll.u32 [#allocation4], 4
      %s184 = int_to_ptr.vmem [resolvable:$true] %s183
      %s185 = sshll.u32 %s6, 4
      %s186 = int_to_ptr.hbm [resolvable:$true] %s185
      %191 = dma.vmem_to_hbm [thread:$0]  %s184, 256, %s186, [#allocation5], 128, 128, 8
    $region37: #{bbb_lrt_linear_forward.1} parent=1 // pred_fallthru
      _
    // Predicated region
    $region38: #{bbb_lrt_linear_forward.1} parent=1 // pred_check
      _
    $region39: #{bbb_lrt_linear_forward.1} parent=1 // pred_check_branch
      %193 = sbr.rel (0) target = $region41
    $region40: #{bbb_lrt_linear_forward.1} parent=1 // pred_region
      %195 = dma.done [#allocation5], 256
    $region41: #{bbb_lrt_linear_forward.1} parent=1 // pred_fallthru
      _
    %196 = vsyncpa [#allocation5], 1

</llo_original>
